<compile_context>
chip_gen: v5e
topology: v5e:2x2
jax: 0.10.0
libtpu: 0.0.40
codegen_flags: <defaults>
</compile_context>

<pallas_src>
import jax
import jax.numpy as jnp
from jax.experimental import pallas as pl
from jax.experimental.pallas import tpu as pltpu

VOCAB = 5
EMB_DIM = 3
OUT_DIM = 5

LANES = 128
MAX_TILE_ROWS = 64  # 64 * 128 = 8192 tokens per grid step (tiny VMEM footprint)


def _round_up(a: int, b: int) -> int:
    return ((a + b - 1) // b) * b


def embed_mlp_kernel(idx_ref, lut_ref, out_ref):
    # idx_ref: (tile_rows, 128) int32 token ids            (VMEM, lane-dense)
    # lut_ref: (VOCAB, OUT_DIM) f32 fused emb @ W.T + b    (SMEM scalars)
    # out_ref: (OUT_DIM, tile_rows, 128) f32               (lane-dense stores)
    idx = idx_ref[...]                                     # (tile_rows, 128)
    # Hoist the vocab compares once (JAX does not CSE broadcasts inside loops).
    masks = [idx == v for v in range(VOCAB)]               # 5 x (tile_rows, 128)
    for c in range(OUT_DIM):
        acc = jnp.zeros(idx.shape, jnp.float32)
        for v in range(VOCAB):
            # Scalar-broadcast select from the SMEM LUT (pure VPU work).
            acc = jnp.where(masks[v], lut_ref[v, c], acc)
        out_ref[c] = acc


def embed_mlp(x, emb_table, w, b):
    """x: (B, S) integer token ids in [0, VOCAB). Returns (B, S, OUT_DIM) f32.

    Same semantics as PyTorch: linear(embedding(x)) = emb[x] @ W.T + b.
    """
    B, S = x.shape
    N = B * S

    # Fuse Embedding + Linear into one small lookup table in the wrapper.
    lut = (emb_table.astype(jnp.float32) @ w.astype(jnp.float32).T
           + b.astype(jnp.float32))                        # (VOCAB, OUT_DIM)

    # Lane-dense token layout: pad N and reshape to (rows, 128).
    rows_needed = -(-N // LANES)
    tile_rows = min(MAX_TILE_ROWS, _round_up(rows_needed, 8))
    rows_total = _round_up(rows_needed, tile_rows)
    n_pad = rows_total * LANES

    idx_flat = x.reshape(-1).astype(jnp.int32)
    idx_flat = jnp.pad(idx_flat, (0, n_pad - N))           # pad with valid id 0
    idx2d = idx_flat.reshape(rows_total, LANES)

    grid = (rows_total // tile_rows,)

    out_t = pl.pallas_call(
        embed_mlp_kernel,
        out_shape=jax.ShapeDtypeStruct((OUT_DIM, rows_total, LANES), jnp.float32),
        grid=grid,
        in_specs=[
            pl.BlockSpec((tile_rows, LANES), lambda i: (i, 0)),     # token tiles
            pl.BlockSpec(memory_space=pltpu.MemorySpace.SMEM),      # fused LUT
        ],
        out_specs=pl.BlockSpec((OUT_DIM, tile_rows, LANES),
                               lambda i: (0, i, 0)),
        compiler_params=pltpu.CompilerParams(
            dimension_semantics=("parallel",)),
    )(idx2d, lut)

    # (OUT_DIM, rows, 128) -> (n_pad, OUT_DIM) -> (B, S, OUT_DIM)
    out = out_t.transpose(1, 2, 0).reshape(n_pad, OUT_DIM)[:N]
    return out.reshape(B, S, OUT_DIM)


if __name__ == "__main__":
    key = jax.random.PRNGKey(0)
    k_emb, k_w, k_b, k_idx = jax.random.split(key, 4)

    # Deterministic parameter init (shapes from EmbedMLP.__init__):
    #   nn.Embedding(5, 3): weight (5, 3) ~ N(0, 1)
    #   nn.Linear(3, 5):    weight (5, 3), bias (5,) ~ U(-1/sqrt(3), 1/sqrt(3))
    emb_table = jax.random.normal(k_emb, (VOCAB, EMB_DIM), dtype=jnp.float32)
    bound = 1.0 / jnp.sqrt(jnp.float32(EMB_DIM))
    w = jax.random.uniform(k_w, (OUT_DIM, EMB_DIM), minval=-bound, maxval=bound,
                           dtype=jnp.float32)
    b = jax.random.uniform(k_b, (OUT_DIM,), minval=-bound, maxval=bound,
                           dtype=jnp.float32)

    # Small input: batch=2, seq=8 of token ids in [0, VOCAB)
    x = jax.random.randint(k_idx, (2, 8), 0, VOCAB, dtype=jnp.int32)

    out = embed_mlp(x, emb_table, w, b)
    out = jax.block_until_ready(out)

    # Reference check (plain JAX) for the same semantics as the PyTorch module.
    ref = emb_table[x] @ w.T + b
    assert out.shape == (2, 8, OUT_DIM)
    assert jnp.allclose(out, ref, atol=1e-5, rtol=1e-5)

    print("KERNEL_OK")
</pallas_src>

<mosaic_0001>
module attributes {stable_mosaic.version = 11 : i64} {
  func.func @embed_mlp_kernel(%arg0: i32, %arg1: memref<8x128xi32, #tpu.memory_space<vmem>>, %arg2: memref<5x5xf32, #tpu.memory_space<smem>>, %arg3: memref<5x8x128xf32, #tpu.memory_space<vmem>>) attributes {dimension_semantics = [#tpu.dimension_semantics<parallel>], iteration_bounds = array<i64: 1>, scalar_prefetch = 0 : i64, scratch_operands = 0 : i64, tpu.core_type = #tpu.core_type<tc>, window_params = [{transform_indices = @transform_0, window_bounds = array<i64: 8, 128>}, {transform_indices = @transform_1, window_bounds = array<i64: 5, 5>}, {transform_indices = @transform_2, window_bounds = array<i64: 5, 8, 128>}]} {
    %c0 = arith.constant 0 : index
    %c0_0 = arith.constant 0 : index
    %0 = vector.load %arg1[%c0, %c0_0] : memref<8x128xi32, #tpu.memory_space<vmem>>, vector<8x128xi32>
    %c0_i32 = arith.constant 0 : i32
    %1 = vector.broadcast %c0_i32 : i32 to vector<8x128xi32>
    %2 = arith.cmpi eq, %0, %1 : vector<8x128xi32>
    %c1_i32 = arith.constant 1 : i32
    %3 = vector.broadcast %c1_i32 : i32 to vector<8x128xi32>
    %4 = arith.cmpi eq, %0, %3 : vector<8x128xi32>
    %c2_i32 = arith.constant 2 : i32
    %5 = vector.broadcast %c2_i32 : i32 to vector<8x128xi32>
    %6 = arith.cmpi eq, %0, %5 : vector<8x128xi32>
    %c3_i32 = arith.constant 3 : i32
    %7 = vector.broadcast %c3_i32 : i32 to vector<8x128xi32>
    %8 = arith.cmpi eq, %0, %7 : vector<8x128xi32>
    %c4_i32 = arith.constant 4 : i32
    %9 = vector.broadcast %c4_i32 : i32 to vector<8x128xi32>
    %10 = arith.cmpi eq, %0, %9 : vector<8x128xi32>
    %cst = arith.constant 0.000000e+00 : f32
    %11 = vector.broadcast %cst : f32 to vector<8x128xf32>
    %c0_1 = arith.constant 0 : index
    %c0_2 = arith.constant 0 : index
    %12 = memref.load %arg2[%c0_1, %c0_2] : memref<5x5xf32, #tpu.memory_space<smem>>
    %13 = vector.broadcast %12 : f32 to vector<8x128xf32>
    %14 = arith.select %2, %13, %11 : vector<8x128xi1>, vector<8x128xf32>
    %c1 = arith.constant 1 : index
    %c0_3 = arith.constant 0 : index
    %15 = memref.load %arg2[%c1, %c0_3] : memref<5x5xf32, #tpu.memory_space<smem>>
    %16 = vector.broadcast %15 : f32 to vector<8x128xf32>
    %17 = arith.select %4, %16, %14 : vector<8x128xi1>, vector<8x128xf32>
    %c2 = arith.constant 2 : index
    %c0_4 = arith.constant 0 : index
    %18 = memref.load %arg2[%c2, %c0_4] : memref<5x5xf32, #tpu.memory_space<smem>>
    %19 = vector.broadcast %18 : f32 to vector<8x128xf32>
    %20 = arith.select %6, %19, %17 : vector<8x128xi1>, vector<8x128xf32>
    %c3 = arith.constant 3 : index
    %c0_5 = arith.constant 0 : index
    %21 = memref.load %arg2[%c3, %c0_5] : memref<5x5xf32, #tpu.memory_space<smem>>
    %22 = vector.broadcast %21 : f32 to vector<8x128xf32>
    %23 = arith.select %8, %22, %20 : vector<8x128xi1>, vector<8x128xf32>
    %c4 = arith.constant 4 : index
    %c0_6 = arith.constant 0 : index
    %24 = memref.load %arg2[%c4, %c0_6] : memref<5x5xf32, #tpu.memory_space<smem>>
    %25 = vector.broadcast %24 : f32 to vector<8x128xf32>
    %26 = arith.select %10, %25, %23 : vector<8x128xi1>, vector<8x128xf32>
    %c0_7 = arith.constant 0 : index
    %c0_8 = arith.constant 0 : index
    %c0_9 = arith.constant 0 : index
    %27 = vector.load %arg3[%c0_7, %c0_8, %c0_9] : memref<5x8x128xf32, #tpu.memory_space<vmem>>, vector<1x8x128xf32>
    %28 = vector.shape_cast %27 : vector<1x8x128xf32> to vector<8x128xf32>
    %29 = vector.shape_cast %26 : vector<8x128xf32> to vector<1x8x128xf32>
    tpu.vector_store %arg3[%c0_7, %c0_8, %c0_9], %29 {strides = array<i32>} : memref<5x8x128xf32, #tpu.memory_space<vmem>>, vector<1x8x128xf32>,
    %cst_10 = arith.constant 0.000000e+00 : f32
    %30 = vector.broadcast %cst_10 : f32 to vector<8x128xf32>
    %c0_11 = arith.constant 0 : index
    %c1_12 = arith.constant 1 : index
    %31 = memref.load %arg2[%c0_11, %c1_12] : memref<5x5xf32, #tpu.memory_space<smem>>
    %32 = vector.broadcast %31 : f32 to vector<8x128xf32>
    %33 = arith.select %2, %32, %30 : vector<8x128xi1>, vector<8x128xf32>
    %c1_13 = arith.constant 1 : index
    %c1_14 = arith.constant 1 : index
    %34 = memref.load %arg2[%c1_13, %c1_14] : memref<5x5xf32, #tpu.memory_space<smem>>
    %35 = vector.broadcast %34 : f32 to vector<8x128xf32>
    %36 = arith.select %4, %35, %33 : vector<8x128xi1>, vector<8x128xf32>
    %c2_15 = arith.constant 2 : index
    %c1_16 = arith.constant 1 : index
    %37 = memref.load %arg2[%c2_15, %c1_16] : memref<5x5xf32, #tpu.memory_space<smem>>
    %38 = vector.broadcast %37 : f32 to vector<8x128xf32>
    %39 = arith.select %6, %38, %36 : vector<8x128xi1>, vector<8x128xf32>
    %c3_17 = arith.constant 3 : index
    %c1_18 = arith.constant 1 : index
    %40 = memref.load %arg2[%c3_17, %c1_18] : memref<5x5xf32, #tpu.memory_space<smem>>
    %41 = vector.broadcast %40 : f32 to vector<8x128xf32>
    %42 = arith.select %8, %41, %39 : vector<8x128xi1>, vector<8x128xf32>
    %c4_19 = arith.constant 4 : index
    %c1_20 = arith.constant 1 : index
    %43 = memref.load %arg2[%c4_19, %c1_20] : memref<5x5xf32, #tpu.memory_space<smem>>
    %44 = vector.broadcast %43 : f32 to vector<8x128xf32>
    %45 = arith.select %10, %44, %42 : vector<8x128xi1>, vector<8x128xf32>
    %c1_21 = arith.constant 1 : index
    %c0_22 = arith.constant 0 : index
    %c0_23 = arith.constant 0 : index
    %46 = vector.load %arg3[%c1_21, %c0_22, %c0_23] : memref<5x8x128xf32, #tpu.memory_space<vmem>>, vector<1x8x128xf32>
    %47 = vector.shape_cast %46 : vector<1x8x128xf32> to vector<8x128xf32>
    %48 = vector.shape_cast %45 : vector<8x128xf32> to vector<1x8x128xf32>
    tpu.vector_store %arg3[%c1_21, %c0_22, %c0_23], %48 {strides = array<i32>} : memref<5x8x128xf32, #tpu.memory_space<vmem>>, vector<1x8x128xf32>,
    %cst_24 = arith.constant 0.000000e+00 : f32
    %49 = vector.broadcast %cst_24 : f32 to vector<8x128xf32>
    %c0_25 = arith.constant 0 : index
    %c2_26 = arith.constant 2 : index
    %50 = memref.load %arg2[%c0_25, %c2_26] : memref<5x5xf32, #tpu.memory_space<smem>>
    %51 = vector.broadcast %50 : f32 to vector<8x128xf32>
    %52 = arith.select %2, %51, %49 : vector<8x128xi1>, vector<8x128xf32>
    %c1_27 = arith.constant 1 : index
    %c2_28 = arith.constant 2 : index
    %53 = memref.load %arg2[%c1_27, %c2_28] : memref<5x5xf32, #tpu.memory_space<smem>>
    %54 = vector.broadcast %53 : f32 to vector<8x128xf32>
    %55 = arith.select %4, %54, %52 : vector<8x128xi1>, vector<8x128xf32>
    %c2_29 = arith.constant 2 : index
    %c2_30 = arith.constant 2 : index
    %56 = memref.load %arg2[%c2_29, %c2_30] : memref<5x5xf32, #tpu.memory_space<smem>>
    %57 = vector.broadcast %56 : f32 to vector<8x128xf32>
    %58 = arith.select %6, %57, %55 : vector<8x128xi1>, vector<8x128xf32>
    %c3_31 = arith.constant 3 : index
    %c2_32 = arith.constant 2 : index
    %59 = memref.load %arg2[%c3_31, %c2_32] : memref<5x5xf32, #tpu.memory_space<smem>>
    %60 = vector.broadcast %59 : f32 to vector<8x128xf32>
    %61 = arith.select %8, %60, %58 : vector<8x128xi1>, vector<8x128xf32>
    %c4_33 = arith.constant 4 : index
    %c2_34 = arith.constant 2 : index
    %62 = memref.load %arg2[%c4_33, %c2_34] : memref<5x5xf32, #tpu.memory_space<smem>>
    %63 = vector.broadcast %62 : f32 to vector<8x128xf32>
    %64 = arith.select %10, %63, %61 : vector<8x128xi1>, vector<8x128xf32>
    %c2_35 = arith.constant 2 : index
    %c0_36 = arith.constant 0 : index
    %c0_37 = arith.constant 0 : index
    %65 = vector.load %arg3[%c2_35, %c0_36, %c0_37] : memref<5x8x128xf32, #tpu.memory_space<vmem>>, vector<1x8x128xf32>
    %66 = vector.shape_cast %65 : vector<1x8x128xf32> to vector<8x128xf32>
    %67 = vector.shape_cast %64 : vector<8x128xf32> to vector<1x8x128xf32>
    tpu.vector_store %arg3[%c2_35, %c0_36, %c0_37], %67 {strides = array<i32>} : memref<5x8x128xf32, #tpu.memory_space<vmem>>, vector<1x8x128xf32>,
    %cst_38 = arith.constant 0.000000e+00 : f32
    %68 = vector.broadcast %cst_38 : f32 to vector<8x128xf32>
    %c0_39 = arith.constant 0 : index
    %c3_40 = arith.constant 3 : index
    %69 = memref.load %arg2[%c0_39, %c3_40] : memref<5x5xf32, #tpu.memory_space<smem>>
    %70 = vector.broadcast %69 : f32 to vector<8x128xf32>
    %71 = arith.select %2, %70, %68 : vector<8x128xi1>, vector<8x128xf32>
    %c1_41 = arith.constant 1 : index
    %c3_42 = arith.constant 3 : index
    %72 = memref.load %arg2[%c1_41, %c3_42] : memref<5x5xf32, #tpu.memory_space<smem>>
    %73 = vector.broadcast %72 : f32 to vector<8x128xf32>
    %74 = arith.select %4, %73, %71 : vector<8x128xi1>, vector<8x128xf32>
    %c2_43 = arith.constant 2 : index
    %c3_44 = arith.constant 3 : index
    %75 = memref.load %arg2[%c2_43, %c3_44] : memref<5x5xf32, #tpu.memory_space<smem>>
    %76 = vector.broadcast %75 : f32 to vector<8x128xf32>
    %77 = arith.select %6, %76, %74 : vector<8x128xi1>, vector<8x128xf32>
    %c3_45 = arith.constant 3 : index
    %c3_46 = arith.constant 3 : index
    %78 = memref.load %arg2[%c3_45, %c3_46] : memref<5x5xf32, #tpu.memory_space<smem>>
    %79 = vector.broadcast %78 : f32 to vector<8x128xf32>
    %80 = arith.select %8, %79, %77 : vector<8x128xi1>, vector<8x128xf32>
    %c4_47 = arith.constant 4 : index
    %c3_48 = arith.constant 3 : index
    %81 = memref.load %arg2[%c4_47, %c3_48] : memref<5x5xf32, #tpu.memory_space<smem>>
    %82 = vector.broadcast %81 : f32 to vector<8x128xf32>
    %83 = arith.select %10, %82, %80 : vector<8x128xi1>, vector<8x128xf32>
    %c3_49 = arith.constant 3 : index
    %c0_50 = arith.constant 0 : index
    %c0_51 = arith.constant 0 : index
    %84 = vector.load %arg3[%c3_49, %c0_50, %c0_51] : memref<5x8x128xf32, #tpu.memory_space<vmem>>, vector<1x8x128xf32>
    %85 = vector.shape_cast %84 : vector<1x8x128xf32> to vector<8x128xf32>
    %86 = vector.shape_cast %83 : vector<8x128xf32> to vector<1x8x128xf32>
    tpu.vector_store %arg3[%c3_49, %c0_50, %c0_51], %86 {strides = array<i32>} : memref<5x8x128xf32, #tpu.memory_space<vmem>>, vector<1x8x128xf32>,
    %cst_52 = arith.constant 0.000000e+00 : f32
    %87 = vector.broadcast %cst_52 : f32 to vector<8x128xf32>
    %c0_53 = arith.constant 0 : index
    %c4_54 = arith.constant 4 : index
    %88 = memref.load %arg2[%c0_53, %c4_54] : memref<5x5xf32, #tpu.memory_space<smem>>
    %89 = vector.broadcast %88 : f32 to vector<8x128xf32>
    %90 = arith.select %2, %89, %87 : vector<8x128xi1>, vector<8x128xf32>
    %c1_55 = arith.constant 1 : index
    %c4_56 = arith.constant 4 : index
    %91 = memref.load %arg2[%c1_55, %c4_56] : memref<5x5xf32, #tpu.memory_space<smem>>
    %92 = vector.broadcast %91 : f32 to vector<8x128xf32>
    %93 = arith.select %4, %92, %90 : vector<8x128xi1>, vector<8x128xf32>
    %c2_57 = arith.constant 2 : index
    %c4_58 = arith.constant 4 : index
    %94 = memref.load %arg2[%c2_57, %c4_58] : memref<5x5xf32, #tpu.memory_space<smem>>
    %95 = vector.broadcast %94 : f32 to vector<8x128xf32>
    %96 = arith.select %6, %95, %93 : vector<8x128xi1>, vector<8x128xf32>
    %c3_59 = arith.constant 3 : index
    %c4_60 = arith.constant 4 : index
    %97 = memref.load %arg2[%c3_59, %c4_60] : memref<5x5xf32, #tpu.memory_space<smem>>
    %98 = vector.broadcast %97 : f32 to vector<8x128xf32>
    %99 = arith.select %8, %98, %96 : vector<8x128xi1>, vector<8x128xf32>
    %c4_61 = arith.constant 4 : index
    %c4_62 = arith.constant 4 : index
    %100 = memref.load %arg2[%c4_61, %c4_62] : memref<5x5xf32, #tpu.memory_space<smem>>
    %101 = vector.broadcast %100 : f32 to vector<8x128xf32>
    %102 = arith.select %10, %101, %99 : vector<8x128xi1>, vector<8x128xf32>
    %c4_63 = arith.constant 4 : index
    %c0_64 = arith.constant 0 : index
    %c0_65 = arith.constant 0 : index
    %103 = vector.load %arg3[%c4_63, %c0_64, %c0_65] : memref<5x8x128xf32, #tpu.memory_space<vmem>>, vector<1x8x128xf32>
    %104 = vector.shape_cast %103 : vector<1x8x128xf32> to vector<8x128xf32>
    %105 = vector.shape_cast %102 : vector<8x128xf32> to vector<1x8x128xf32>
    tpu.vector_store %arg3[%c4_63, %c0_64, %c0_65], %105 {strides = array<i32>} : memref<5x8x128xf32, #tpu.memory_space<vmem>>, vector<1x8x128xf32>,
    return
  }
  func.func @transform_0(%arg0: i32) -> (i32, i32) {
    %c0_i32 = arith.constant 0 : i32
    %c0_i32_0 = arith.constant 0 : i32
    return %arg0, %c0_i32 : i32, i32
  }
  func.func @transform_1(%arg0: i32) -> (i32, i32) {
    %c0_i32 = arith.constant 0 : i32
    %c0_i32_0 = arith.constant 0 : i32
    %c0_i32_1 = arith.constant 0 : i32
    return %c0_i32, %c0_i32_0 : i32, i32
  }
  func.func @transform_2(%arg0: i32) -> (i32, i32, i32) {
    %c0_i32 = arith.constant 0 : i32
    %c0_i32_0 = arith.constant 0 : i32
    %c0_i32_1 = arith.constant 0 : i32
    return %c0_i32, %arg0, %c0_i32_0 : i32, i32, i32
  }
}

</mosaic_0001>

<llo_original>
// kernel: tpu_custom_call.1
$region0: #{tpu_custom_call.1}
  #allocation0 [shape = 'u32[]', space=smem, size = 0x4, offset = 0x4, fixed_abs, tag = 'smem constant byte address 0x4 - core index']
  #allocation1 [shape = 'u32[72,128]{1,0:T(1,128)}', space=vmem, size = 0x9000, scoped, tag = 'internal scratch']
  %s0 = inlined_call_operand.hbm [shape: s32[8,128], index: 0, kind: input, shape index: {}]
  %s1 = inlined_call_operand.hbm [shape: f32[5,5], index: 1, kind: input, shape index: {}]
  %s2 = inlined_call_operand.hbm [shape: f32[5,8,128], index: 2, kind: output, shape index: {}]
  %s3 = sld [smem:[#allocation0]]
  $region26: #{tpu_custom_call.1} parent=0
    _
  %s5 = ssub.s32 1, %s3
  %s6 = scalar_select 0, %s5, %s3
  $region1: #{tpu_custom_call.1} parent=0
    #allocation2 [shape = 'u8[4096]{0}', space=vmem, size = 0x1000, scoped, tag = 'input window, operand 0, single buffered']
    #allocation3 [shape = 's32[1]{0}', space=sflag, size = 0x4, scoped, tag = 'scoped memory for tpu_custom_call.1']
    #allocation4 [shape = 's32[1]{0}', space=sflag, size = 0x4, scoped, tag = 'scoped memory for tpu_custom_call.1']
    #allocation5 [shape = 's32[1]{0}', space=sflag, size = 0x4, scoped, tag = 'scoped memory for tpu_custom_call.1']
    #allocation6 [shape = 'u8[4096]{0}', space=smem, size = 0x1000, scoped, tag = 'input window, operand 1, single buffered']
    #allocation7 [shape = 'u8[20480]{0}', space=vmem, size = 0x5000, scoped, tag = 'output window, operand 0, single buffered']
    %7 = vsyncpa [#allocation3], 0
    %8 = vsyncpa [#allocation5], 0
    %9 = vsyncpa [#allocation4], 0
    // Predicated region
    $region2: #{tpu_custom_call.1} parent=1 // pred_check
      _
    $region3: #{tpu_custom_call.1} parent=1 // pred_check_branch
      %11 = sbr.rel (0) target = $region5
    $region4: #{tpu_custom_call.1} parent=1 // pred_region
      %13 = vsyncadd [#allocation3], 0
      %s15 = sshll.u32 %s0, 4
      %s16 = int_to_ptr.hbm [resolvable:$true] %s15
      %s17 = sshll.u32 [#allocation2], 4
      %s18 = int_to_ptr.vmem [resolvable:$true] %s17
      %20 = dma.hbm_to_vmem [thread:$0]  %s16, 128, %s18, [#allocation3]
    $region5: #{tpu_custom_call.1} parent=1 // pred_fallthru
      _
    // Predicated region
    $region6: #{tpu_custom_call.1} parent=1 // pred_check
      _
    $region7: #{tpu_custom_call.1} parent=1 // pred_check_branch
      %22 = sbr.rel (0) target = $region9
    $region8: #{tpu_custom_call.1} parent=1 // pred_region
      %24 = vsyncadd [#allocation5], 0
      %s26 = sshll.u32 %s1, 4
      %s27 = int_to_ptr.hbm [resolvable:$true] %s26
      %29 = dma.hbm_to_smem %s27, 128, [#allocation6], [#allocation5]
    $region9: #{tpu_custom_call.1} parent=1 // pred_fallthru
      _
    // Predicated region
    $region10: #{tpu_custom_call.1} parent=1 // pred_check
      _
    $region11: #{tpu_custom_call.1} parent=1 // pred_check_branch
      %31 = sbr.rel (0) target = $region13
    $region12: #{tpu_custom_call.1} parent=1 // pred_region
      %33 = dma.done [#allocation3], 128
    $region13: #{tpu_custom_call.1} parent=1 // pred_fallthru
      _
    // Predicated region
    $region14: #{tpu_custom_call.1} parent=1 // pred_check
      _
    $region15: #{tpu_custom_call.1} parent=1 // pred_check_branch
      %35 = sbr.rel (0) target = $region17
    $region16: #{tpu_custom_call.1} parent=1 // pred_region
      %37 = dma.done [#allocation5], 128
    $region17: #{tpu_custom_call.1} parent=1 // pred_fallthru
      _
    %38 = sfence
    %v39 = vld [vmem:[#allocation2] sm:$0xff]
    %vm40 = vcmp.eq.s32.totalorder %v39, 0
    %vm41 = vcmp.eq.s32.totalorder %v39, 1
    %vm42 = vcmp.eq.s32.totalorder %v39, 2
    %vm43 = vcmp.eq.s32.totalorder %v39, 3
    %vm44 = vcmp.eq.s32.totalorder %v39, 4
    %s45 = sld [smem:[#allocation6]]
    %v46 = vstv %s45
    %v47 = vsel %vm40, %v46, 0.0
    %s48 = sld [smem:[#allocation6 + $0x80]]
    %v49 = vstv %s48
    %v50 = vsel %vm41, %v49, %v47
    %s51 = sld [smem:[#allocation6 + $0x100]]
    %v52 = vstv %s51
    %v53 = vsel %vm42, %v52, %v50
    %s54 = sld [smem:[#allocation6 + $0x180]]
    %v55 = vstv %s54
    %v56 = vsel %vm43, %v55, %v53
    %s57 = sld [smem:[#allocation6 + $0x200]]
    %v58 = vstv %s57
    %v59 = vsel %vm44, %v58, %v56
    %60 = vst [vmem:[#allocation7] sm:$0xff] %v59
    %s61 = sld [smem:[#allocation6 + $0x1]]
    %v62 = vstv %s61
    %v63 = vsel %vm40, %v62, 0.0
    %s64 = sld [smem:[#allocation6 + $0x81]]
    %v65 = vstv %s64
    %v66 = vsel %vm41, %v65, %v63
    %s67 = sld [smem:[#allocation6 + $0x101]]
    %v68 = vstv %s67
    %v69 = vsel %vm42, %v68, %v66
    %s70 = sld [smem:[#allocation6 + $0x181]]
    %v71 = vstv %s70
    %v72 = vsel %vm43, %v71, %v69
    %s73 = sld [smem:[#allocation6 + $0x201]]
    %v74 = vstv %s73
    %v75 = vsel %vm44, %v74, %v72
    %s76 = scalar_lea.vmem [#allocation7], 8
    %77 = vst [vmem:[%s76] sm:$0xff] %v75
    %s78 = sld [smem:[#allocation6 + $0x2]]
    %v79 = vstv %s78
    %v80 = vsel %vm40, %v79, 0.0
    %s81 = sld [smem:[#allocation6 + $0x82]]
    %v82 = vstv %s81
    %v83 = vsel %vm41, %v82, %v80
    %s84 = sld [smem:[#allocation6 + $0x102]]
    %v85 = vstv %s84
    %v86 = vsel %vm42, %v85, %v83
    %s87 = sld [smem:[#allocation6 + $0x182]]
    %v88 = vstv %s87
    %v89 = vsel %vm43, %v88, %v86
    %s90 = sld [smem:[#allocation6 + $0x202]]
    %v91 = vstv %s90
    %v92 = vsel %vm44, %v91, %v89
    %s93 = scalar_lea.vmem [#allocation7], 16
    %94 = vst [vmem:[%s93] sm:$0xff] %v92
    %s95 = sld [smem:[#allocation6 + $0x3]]
    %v96 = vstv %s95
    %v97 = vsel %vm40, %v96, 0.0
    %s98 = sld [smem:[#allocation6 + $0x83]]
    %v99 = vstv %s98
    %v100 = vsel %vm41, %v99, %v97
    %s101 = sld [smem:[#allocation6 + $0x103]]
    %v102 = vstv %s101
    %v103 = vsel %vm42, %v102, %v100
    %s104 = sld [smem:[#allocation6 + $0x183]]
    %v105 = vstv %s104
    %v106 = vsel %vm43, %v105, %v103
    %s107 = sld [smem:[#allocation6 + $0x203]]
    %v108 = vstv %s107
    %v109 = vsel %vm44, %v108, %v106
    %s110 = scalar_lea.vmem [#allocation7], 24
    %111 = vst [vmem:[%s110] sm:$0xff] %v109
    %s112 = sld [smem:[#allocation6 + $0x4]]
    %v113 = vstv %s112
    %v114 = vsel %vm40, %v113, 0.0
    %s115 = sld [smem:[#allocation6 + $0x84]]
    %v116 = vstv %s115
    %v117 = vsel %vm41, %v116, %v114
    %s118 = sld [smem:[#allocation6 + $0x104]]
    %v119 = vstv %s118
    %v120 = vsel %vm42, %v119, %v117
    %s121 = sld [smem:[#allocation6 + $0x184]]
    %v122 = vstv %s121
    %v123 = vsel %vm43, %v122, %v120
    %s124 = sld [smem:[#allocation6 + $0x204]]
    %v125 = vstv %s124
    %v126 = vsel %vm44, %v125, %v123
    %s127 = scalar_lea.vmem [#allocation7], 32
    %128 = vst [vmem:[%s127] sm:$0xff] %v126
    // Predicated region
    $region18: #{tpu_custom_call.1} parent=1 // pred_check
      _
    $region19: #{tpu_custom_call.1} parent=1 // pred_check_branch
      %130 = sbr.rel (0) target = $region21
    $region20: #{tpu_custom_call.1} parent=1 // pred_region
      %132 = vsyncadd [#allocation4], 0
      %s133 = sshll.u32 [#allocation7], 4
      %s134 = int_to_ptr.vmem [resolvable:$true] %s133
      %s135 = sshll.u32 %s2, 4
      %s136 = int_to_ptr.hbm [resolvable:$true] %s135
      %141 = dma.vmem_to_hbm [thread:$0]  %s134, 640, %s136, [#allocation4], 128, 128, 8
    $region21: #{tpu_custom_call.1} parent=1 // pred_fallthru
      _
    // Predicated region
    $region22: #{tpu_custom_call.1} parent=1 // pred_check
      _
    $region23: #{tpu_custom_call.1} parent=1 // pred_check_branch
      %143 = sbr.rel (0) target = $region25
    $region24: #{tpu_custom_call.1} parent=1 // pred_region
      %145 = dma.done [#allocation4], 640
    $region25: #{tpu_custom_call.1} parent=1 // pred_fallthru
      _
    %146 = vsyncpa [#allocation3], 1
    %147 = vsyncpa [#allocation4], 1
    %148 = vsyncpa [#allocation5], 1

</llo_original>
